<compile_context>
chip_gen: v6e
topology: v6e:2x2x1
jax: 0.10.0
libtpu: 0.0.40
codegen_flags: <defaults>
</compile_context>

<pallas_src>
import jax
import jax.numpy as jnp
from jax.experimental import pallas as pl
from jax.experimental.pallas import tpu as pltpu

LANE = 128
F32 = jnp.float32


def _round_up(n, m):
    return ((n + m - 1) // m) * m


def _qnetwork_kernel(x_ref, w1_ref, b1_ref, w2_ref, b2_ref, w3_ref, b3_ref,
                     out_ref, xpad_ref):
    # x_ref:    (TB, in_dim)   raw (unpadded) input tile, caller dtype
    # xpad_ref: (TB, K1)       VMEM scratch, matmul dtype, zero-padded features
    # w1_ref:   (K1, HP)       b1_ref: (1, HP)
    # w2_ref:   (HP, HP)       b2_ref: (1, HP)
    # w3_ref:   (HP, NP)       b3_ref: (1, out_dim)
    # out_ref:  (TB, out_dim)  unpadded output tile (masked store)
    in_dim = x_ref.shape[1]
    out_dim = out_ref.shape[1]

    # Zero-pad the 9 input features to the aligned contraction width in VMEM
    # (no padded copy of x ever touches HBM).
    xpad_ref[...] = jnp.zeros_like(xpad_ref)
    xpad_ref[:, :in_dim] = x_ref[...].astype(xpad_ref.dtype)

    # fc1 + ReLU  (bf16/f32 MXU operands, f32 accumulate, f32 epilogue)
    h1 = jnp.dot(xpad_ref[...], w1_ref[...], preferred_element_type=F32)
    h1 = jnp.maximum(h1 + b1_ref[...], 0.0)

    # fc2 + ReLU
    h2 = jnp.dot(h1.astype(w2_ref.dtype), w2_ref[...], preferred_element_type=F32)
    h2 = jnp.maximum(h2 + b2_ref[...], 0.0)

    # fc3 (padded N for an aligned matmul; slice to the real 9 outputs at store)
    out = jnp.dot(h2.astype(w3_ref.dtype), w3_ref[...], preferred_element_type=F32)
    out_ref[...] = (out[:, :out_dim] + b3_ref[...]).astype(out_ref.dtype)


def prepare_params(params, *, use_bf16=True):
    """Pad/cast QNetwork weights ONCE (outside the per-forward path)."""
    mm_dtype = jnp.bfloat16 if use_bf16 else jnp.float32
    w1, b1 = params["w1"], params["b1"]
    w2, b2 = params["w2"], params["b2"]
    w3, b3 = params["w3"], params["b3"]

    in_dim, hidden = w1.shape
    out_dim = w3.shape[1]

    k1 = _round_up(in_dim, LANE)                 # padded contraction for fc1
    # v6e/v7x MXUs are 2x256x256: pad hidden to 256 once it exceeds one tile.
    h_mult = 256 if hidden > LANE else LANE
    hp = _round_up(hidden, h_mult)
    np_ = _round_up(out_dim, LANE)               # padded N for the fc3 matmul

    def pad2(a, rows, cols, dtype):
        out = jnp.zeros((rows, cols), dtype)
        return out.at[: a.shape[0], : a.shape[1]].set(a.astype(dtype))

    return {
        "w1": pad2(w1, k1, hp, mm_dtype),
        "b1": pad2(b1.reshape(1, -1), 1, hp, F32),
        "w2": pad2(w2, hp, hp, mm_dtype),
        "b2": pad2(b2.reshape(1, -1), 1, hp, F32),
        "w3": pad2(w3, hp, np_, mm_dtype),
        "b3": b3.reshape(1, -1).astype(F32),     # (1, out_dim), unpadded
    }


def qnetwork_forward(x, prepared, *, tb=1024, out_dtype=jnp.float32):
    """x: (B, 9) array; prepared: output of prepare_params()."""
    w1p, b1p = prepared["w1"], prepared["b1"]
    w2p, b2p = prepared["w2"], prepared["b2"]
    w3p, b3p = prepared["w3"], prepared["b3"]

    B, in_dim = x.shape
    k1, hp = w1p.shape
    np_ = w3p.shape[1]
    out_dim = b3p.shape[1]
    assert in_dim <= k1 and b1p.shape[1] == hp

    mm_dtype = w1p.dtype
    mm_bytes = jnp.dtype(mm_dtype).itemsize
    out_bytes = jnp.dtype(out_dtype).itemsize

    # Batch tile: bf16 packs 16 rows per sublane group; cap at ceil(B/2) so the
    # "parallel" batch grid always has >= 2 steps (feeds both v7x TensorCores).
    row_align = 16 if mm_dtype == jnp.bfloat16 else 8
    two_core_cap = _round_up(-(-B // 2), row_align)
    tb = max(row_align, min(_round_up(tb, row_align), two_core_cap))
    bp = _round_up(B, tb)
    grid = (bp // tb,)

    xp = x if bp == B else jnp.pad(x, ((0, bp - B), (0, 0)))

    # --- VMEM accounting (physical, lane/sublane-padded footprints). ---
    def footprint(shape, dtype):
        r, c = shape
        sub = 16 if dtype == jnp.bfloat16 else 8
        return _round_up(r, sub) * _round_up(c, LANE) * jnp.dtype(dtype).itemsize

    weight_set = (footprint(w1p.shape, mm_dtype) + footprint(w2p.shape, mm_dtype)
                  + footprint(w3p.shape, mm_dtype) + footprint(b1p.shape, F32)
                  + footprint(b2p.shape, F32) + footprint(b3p.shape, F32))
    # Large resident weights: single-buffer their (constant-index) blocks so
    # hidden sizes in the thousands still fit v7x's 64 MiB VMEM.
    single_buffer_weights = weight_set > (8 << 20)
    weight_bufs = 1 if single_buffer_weights else 2

    tile_bytes = (2 * footprint((tb, in_dim), x.dtype)        # x double-buffer
                  + 2 * footprint((tb, out_dim), out_dtype)   # out double-buffer
                  + footprint((tb, k1), mm_dtype))            # xpad scratch
    interm_bytes = tb * hp * (3 * 4 + 2 * mm_bytes) + tb * np_ * 4
    want = int(1.25 * (weight_bufs * weight_set + tile_bytes + interm_bytes))

    try:
        vmem_cap = int(pltpu.get_tpu_info().vmem_capacity_bytes)
    except Exception:
        vmem_cap = 64 << 20                                   # v7x worst case
    cap = min(48 << 20, (vmem_cap * 3) // 4)
    vmem_limit = min(cap, max(16 << 20, want))

    # Advisory cost estimate for the XLA scheduler.
    flops = 2 * bp * (k1 * hp + hp * hp + hp * np_)
    bytes_accessed = int(bp * in_dim * jnp.dtype(x.dtype).itemsize
                         + bp * out_dim * out_bytes + weight_set)
    cost = pl.CostEstimate(flops=flops, transcendentals=0,
                           bytes_accessed=bytes_accessed)

    def const_spec(shape):
        nd = len(shape)
        if single_buffer_weights:
            return pl.BlockSpec(shape, lambda *_: (0,) * nd,
                                pipeline_mode=pl.Buffered(1))
        return pl.BlockSpec(shape, lambda *_: (0,) * nd)

    out = pl.pallas_call(
        _qnetwork_kernel,
        out_shape=jax.ShapeDtypeStruct((bp, out_dim), out_dtype),
        grid=grid,
        in_specs=[
            pl.BlockSpec((tb, in_dim), lambda i: (i, 0)),     # x: batch-tiled, unpadded
            const_spec(w1p.shape), const_spec(b1p.shape),     # weights: VMEM-resident
            const_spec(w2p.shape), const_spec(b2p.shape),
            const_spec(w3p.shape), const_spec(b3p.shape),
        ],
        out_specs=pl.BlockSpec((tb, out_dim), lambda i: (i, 0)),
        scratch_shapes=[pltpu.VMEM((tb, k1), mm_dtype)],      # in-kernel feature pad
        compiler_params=pltpu.CompilerParams(
            dimension_semantics=("parallel",),
            vmem_limit_bytes=vmem_limit,
        ),
        cost_estimate=cost,
    )(xp, w1p, b1p, w2p, b2p, w3p, b3p)

    return out if bp == B else out[:B]


def init_params(key, hidden_size=128, in_dim=9, out_dim=9):
    """Deterministic init matching PyTorch nn.Linear shapes (stored (in, out))."""
    ks = jax.random.split(key, 6)

    def linear(kw, kb, fan_in, fan_out):
        bound = 1.0 / jnp.sqrt(fan_in)
        w = jax.random.uniform(kw, (fan_in, fan_out), jnp.float32, -bound, bound)
        b = jax.random.uniform(kb, (1, fan_out), jnp.float32, -bound, bound)
        return w, b

    w1, b1 = linear(ks[0], ks[1], in_dim, hidden_size)
    w2, b2 = linear(ks[2], ks[3], hidden_size, hidden_size)
    w3, b3 = linear(ks[4], ks[5], hidden_size, out_dim)
    return {"w1": w1, "b1": b1, "w2": w2, "b2": b2, "w3": w3, "b3": b3}


if __name__ == "__main__":
    key = jax.random.PRNGKey(0)
    k_params, k_x = jax.random.split(key)

    hidden_size = 32     # small hidden for the example (padded to 128 inside)
    batch = 300          # ragged vs. tb=128 -> 3 grid steps + batch padding

    params = init_params(k_params, hidden_size=hidden_size)
    prepared = prepare_params(params, use_bf16=True)   # pad/cast once, reuse

    # Tic-tac-toe boards encoded as 9 floats in {-1, 0, 1}.
    x = jax.random.randint(k_x, (batch, 9), -1, 2).astype(jnp.float32)

    out = qnetwork_forward(x, prepared, tb=128)
    out = jax.block_until_ready(out)

    # Reference mirroring the kernel's bf16-operand / f32-accumulate path.
    def ref_layer(h, w, b, relu):
        y = jnp.dot(h.astype(jnp.bfloat16), w.astype(jnp.bfloat16),
                    preferred_element_type=jnp.float32) + b
        return jnp.maximum(y, 0.0) if relu else y

    ref = ref_layer(x, params["w1"], params["b1"], True)
    ref = ref_layer(ref, params["w2"], params["b2"], True)
    ref = ref_layer(ref, params["w3"], params["b3"], False)

    assert out.shape == (batch, 9)
    assert out.dtype == jnp.float32
    assert jnp.allclose(out, ref, atol=2e-2, rtol=2e-2), \
        float(jnp.max(jnp.abs(out - ref)))

    print("KERNEL_OK")
</pallas_src>

<mosaic_0001>
module attributes {stable_mosaic.version = 11 : i64} {
  func.func @_qnetwork_kernel(%arg0: i32, %arg1: memref<128x9xf32, #tpu.memory_space<vmem>>, %arg2: memref<128x128xbf16, #tpu.memory_space<vmem>>, %arg3: memref<1x128xf32, #tpu.memory_space<vmem>>, %arg4: memref<128x128xbf16, #tpu.memory_space<vmem>>, %arg5: memref<1x128xf32, #tpu.memory_space<vmem>>, %arg6: memref<128x128xbf16, #tpu.memory_space<vmem>>, %arg7: memref<1x9xf32, #tpu.memory_space<vmem>>, %arg8: memref<128x9xf32, #tpu.memory_space<vmem>>, %arg9: memref<128x128xbf16, #tpu.memory_space<vmem>>) attributes {dimension_semantics = [#tpu.dimension_semantics<parallel>], iteration_bounds = array<i64: 3>, scalar_prefetch = 0 : i64, scratch_operands = 1 : i64, tpu.core_type = #tpu.core_type<tc>, window_params = [{transform_indices = @transform_0, window_bounds = array<i64: 128, 9>}, {pipeline_mode = #tpu.pipeline_mode<synchronous>, transform_indices = @transform_1, window_bounds = array<i64: 128, 128>}, {pipeline_mode = #tpu.pipeline_mode<synchronous>, transform_indices = @transform_2, window_bounds = array<i64: 1, 128>}, {pipeline_mode = #tpu.pipeline_mode<synchronous>, transform_indices = @transform_3, window_bounds = array<i64: 128, 128>}, {pipeline_mode = #tpu.pipeline_mode<synchronous>, transform_indices = @transform_4, window_bounds = array<i64: 1, 128>}, {pipeline_mode = #tpu.pipeline_mode<synchronous>, transform_indices = @transform_5, window_bounds = array<i64: 128, 128>}, {pipeline_mode = #tpu.pipeline_mode<synchronous>, transform_indices = @transform_6, window_bounds = array<i64: 1, 9>}, {transform_indices = @transform_7, window_bounds = array<i64: 128, 9>}]} {
    %cst = arith.constant 0.000000e+00 : bf16
    %0 = vector.broadcast %cst : bf16 to vector<128x128xbf16>
    %c0 = arith.constant 0 : index
    %c0_0 = arith.constant 0 : index
    %1 = vector.load %arg9[%c0, %c0_0] : memref<128x128xbf16, #tpu.memory_space<vmem>>, vector<128x128xbf16>
    tpu.vector_store %arg9[%c0, %c0_0], %0 {strides = array<i32>} : memref<128x128xbf16, #tpu.memory_space<vmem>>, vector<128x128xbf16>,
    %c0_1 = arith.constant 0 : index
    %c0_2 = arith.constant 0 : index
    %2 = vector.load %arg1[%c0_1, %c0_2] : memref<128x9xf32, #tpu.memory_space<vmem>>, vector<128x9xf32>
    %3 = arith.truncf %2 : vector<128x9xf32> to vector<128x9xbf16>
    %c0_3 = arith.constant 0 : index
    %c0_4 = arith.constant 0 : index
    %4 = vector.load %arg9[%c0_3, %c0_4] : memref<128x128xbf16, #tpu.memory_space<vmem>>, vector<128x9xbf16>
    tpu.vector_store %arg9[%c0_3, %c0_4], %3 {strides = array<i32>} : memref<128x128xbf16, #tpu.memory_space<vmem>>, vector<128x9xbf16>,
    %c0_5 = arith.constant 0 : index
    %c0_6 = arith.constant 0 : index
    %5 = vector.load %arg9[%c0_5, %c0_6] : memref<128x128xbf16, #tpu.memory_space<vmem>>, vector<128x128xbf16>
    %c0_7 = arith.constant 0 : index
    %c0_8 = arith.constant 0 : index
    %6 = vector.load %arg2[%c0_7, %c0_8] : memref<128x128xbf16, #tpu.memory_space<vmem>>, vector<128x128xbf16>
    %cst_9 = arith.constant dense<0.000000e+00> : vector<128x128xf32>
    %7 = tpu.matmul %5, %6, %cst_9 {dimension_numbers = #tpu.dot_dimension_numbers<[1], [0], [0], [1], [0, 0, 1, 1], [], []>} : vector<128x128xbf16>, vector<128x128xbf16>, vector<128x128xf32> -> vector<128x128xf32>
    %c0_10 = arith.constant 0 : index
    %c0_11 = arith.constant 0 : index
    %8 = vector.load %arg3[%c0_10, %c0_11] : memref<1x128xf32, #tpu.memory_space<vmem>>, vector<1x128xf32>
    %9 = vector.broadcast %8 : vector<1x128xf32> to vector<128x128xf32>
    %10 = arith.addf %7, %9 : vector<128x128xf32>
    %cst_12 = arith.constant 0.000000e+00 : f32
    %11 = vector.broadcast %cst_12 : f32 to vector<128x128xf32>
    %12 = arith.maximumf %10, %11 : vector<128x128xf32>
    %13 = arith.truncf %12 : vector<128x128xf32> to vector<128x128xbf16>
    %c0_13 = arith.constant 0 : index
    %c0_14 = arith.constant 0 : index
    %14 = vector.load %arg4[%c0_13, %c0_14] : memref<128x128xbf16, #tpu.memory_space<vmem>>, vector<128x128xbf16>
    %cst_15 = arith.constant dense<0.000000e+00> : vector<128x128xf32>
    %15 = tpu.matmul %13, %14, %cst_15 {dimension_numbers = #tpu.dot_dimension_numbers<[1], [0], [0], [1], [0, 0, 1, 1], [], []>} : vector<128x128xbf16>, vector<128x128xbf16>, vector<128x128xf32> -> vector<128x128xf32>
    %c0_16 = arith.constant 0 : index
    %c0_17 = arith.constant 0 : index
    %16 = vector.load %arg5[%c0_16, %c0_17] : memref<1x128xf32, #tpu.memory_space<vmem>>, vector<1x128xf32>
    %17 = vector.broadcast %16 : vector<1x128xf32> to vector<128x128xf32>
    %18 = arith.addf %15, %17 : vector<128x128xf32>
    %cst_18 = arith.constant 0.000000e+00 : f32
    %19 = vector.broadcast %cst_18 : f32 to vector<128x128xf32>
    %20 = arith.maximumf %18, %19 : vector<128x128xf32>
    %21 = arith.truncf %20 : vector<128x128xf32> to vector<128x128xbf16>
    %c0_19 = arith.constant 0 : index
    %c0_20 = arith.constant 0 : index
    %22 = vector.load %arg6[%c0_19, %c0_20] : memref<128x128xbf16, #tpu.memory_space<vmem>>, vector<128x128xbf16>
    %cst_21 = arith.constant dense<0.000000e+00> : vector<128x128xf32>
    %23 = tpu.matmul %21, %22, %cst_21 {dimension_numbers = #tpu.dot_dimension_numbers<[1], [0], [0], [1], [0, 0, 1, 1], [], []>} : vector<128x128xbf16>, vector<128x128xbf16>, vector<128x128xf32> -> vector<128x128xf32>
    %24 = vector.extract_strided_slice %23 {offsets = [0, 0], sizes = [128, 9], strides = [1, 1]} : vector<128x128xf32> to vector<128x9xf32>
    %c0_22 = arith.constant 0 : index
    %c0_23 = arith.constant 0 : index
    %25 = vector.load %arg7[%c0_22, %c0_23] : memref<1x9xf32, #tpu.memory_space<vmem>>, vector<1x9xf32>
    %26 = vector.broadcast %25 : vector<1x9xf32> to vector<128x9xf32>
    %27 = arith.addf %24, %26 : vector<128x9xf32>
    %c0_24 = arith.constant 0 : index
    %c0_25 = arith.constant 0 : index
    %28 = vector.load %arg8[%c0_24, %c0_25] : memref<128x9xf32, #tpu.memory_space<vmem>>, vector<128x9xf32>
    tpu.vector_store %arg8[%c0_24, %c0_25], %27 {strides = array<i32>} : memref<128x9xf32, #tpu.memory_space<vmem>>, vector<128x9xf32>,
    return
  }
  func.func @transform_0(%arg0: i32) -> (i32, i32) {
    %c0_i32 = arith.constant 0 : i32
    %c0_i32_0 = arith.constant 0 : i32
    return %arg0, %c0_i32 : i32, i32
  }
  func.func @transform_1(%arg0: i32) -> (i32, i32) {
    %c0_i32 = arith.constant 0 : i32
    %c0_i32_0 = arith.constant 0 : i32
    %c0_i32_1 = arith.constant 0 : i32
    return %c0_i32, %c0_i32_0 : i32, i32
  }
  func.func @transform_2(%arg0: i32) -> (i32, i32) {
    %c0_i32 = arith.constant 0 : i32
    %c0_i32_0 = arith.constant 0 : i32
    %c0_i32_1 = arith.constant 0 : i32
    return %c0_i32, %c0_i32_0 : i32, i32
  }
  func.func @transform_3(%arg0: i32) -> (i32, i32) {
    %c0_i32 = arith.constant 0 : i32
    %c0_i32_0 = arith.constant 0 : i32
    %c0_i32_1 = arith.constant 0 : i32
    return %c0_i32, %c0_i32_0 : i32, i32
  }
  func.func @transform_4(%arg0: i32) -> (i32, i32) {
    %c0_i32 = arith.constant 0 : i32
    %c0_i32_0 = arith.constant 0 : i32
    %c0_i32_1 = arith.constant 0 : i32
    return %c0_i32, %c0_i32_0 : i32, i32
  }
  func.func @transform_5(%arg0: i32) -> (i32, i32) {
    %c0_i32 = arith.constant 0 : i32
    %c0_i32_0 = arith.constant 0 : i32
    %c0_i32_1 = arith.constant 0 : i32
    return %c0_i32, %c0_i32_0 : i32, i32
  }
  func.func @transform_6(%arg0: i32) -> (i32, i32) {
    %c0_i32 = arith.constant 0 : i32
    %c0_i32_0 = arith.constant 0 : i32
    %c0_i32_1 = arith.constant 0 : i32
    return %c0_i32, %c0_i32_0 : i32, i32
  }
  func.func @transform_7(%arg0: i32) -> (i32, i32) {
    %c0_i32 = arith.constant 0 : i32
    %c0_i32_0 = arith.constant 0 : i32
    return %arg0, %c0_i32 : i32, i32
  }
}

</mosaic_0001>

<llo_original>
// kernel: tpu_custom_call.1
$region0: #{tpu_custom_call.1}
  #allocation0 [shape = 'u32[]', space=smem, size = 0x4, offset = 0x4, fixed_abs, tag = 'smem constant byte address 0x4 - core index']
  #allocation1 [shape = 'u32[144,128]{1,0:T(1,128)}', space=vmem, size = 0x12000, scoped, tag = 'internal scratch']
  #allocation2 [shape = 'bf16[128,128]{1,0:T(8,128)(2,1)}', space=vmem, size = 0x8000, scoped, tag = 'scratch operand']
  %s0 = inlined_call_operand.vmem [shape: f32[384,9], index: 0, kind: input, shape index: {}]
  %s1 = inlined_call_operand.vmem [shape: bf16[128,128], index: 1, kind: input, shape index: {}]
  %s2 = inlined_call_operand.vmem [shape: f32[1,128], index: 2, kind: input, shape index: {}]
  %s3 = inlined_call_operand.vmem [shape: bf16[128,128], index: 3, kind: input, shape index: {}]
  %s4 = inlined_call_operand.vmem [shape: f32[1,128], index: 4, kind: input, shape index: {}]
  %s5 = inlined_call_operand.vmem [shape: bf16[128,128], index: 5, kind: input, shape index: {}]
  %s6 = inlined_call_operand.vmem [shape: f32[1,9], index: 6, kind: input, shape index: {}]
  %s7 = inlined_call_operand.vmem [shape: f32[384,9], index: 7, kind: output, shape index: {}]
  %s8 = sld [smem:[#allocation0]]
  $region61: #{tpu_custom_call.1} parent=0
    _
  %s10 = ssub.s32 1, %s8
  %s11 = scalar_select 0, %s10, %s8
  loop: start=0, step=1, limit=5
  $region2: #{tpu_custom_call.1} parent=0 // loop_pre_header
    _
  $region3: #{tpu_custom_call.1} parent=0 // loop_header
    %s13 = sphi 0, %s17
    %p14 = scmp.ge.s32.totalorder %s13, 5
    %s23 = sphi 0, %s25
    %s26 = sphi 0, %s23
    %s27 = sphi 0, %s26
    %s43 = sphi 0, %s27
    %s47 = sphi 0, %s47
    %s49 = sphi 0, %s47
    %s50 = sphi 0, %s49
    %s64 = sphi 0, %s50
    %s68 = sphi 0, %s68
    %s70 = sphi 0, %s68
    %s71 = sphi 0, %s70
    %s85 = sphi 0, %s71
    %s89 = sphi 0, %s89
    %s91 = sphi 0, %s89
    %s92 = sphi 0, %s91
    %s106 = sphi 0, %s92
    %s110 = sphi 0, %s110
    %s112 = sphi 0, %s110
    %s113 = sphi 0, %s112
    %s127 = sphi 0, %s113
    %s131 = sphi 0, %s131
    %s133 = sphi 0, %s131
    %s134 = sphi 0, %s133
    %s148 = sphi 0, %s134
    %s152 = sphi 0, %s152
    %s154 = sphi 0, %s152
    %s155 = sphi 0, %s154
    %s169 = sphi 0, %s155
    %s175 = sphi 0, %s177
    %s178 = sphi 0, %s175
    %s179 = sphi 0, %s178
    %s195 = sphi 0, %s179
  $region4: #{tpu_custom_call.1} parent=0 // loop_header_branch
    %16 = sbr.rel (%p14) target = $region8
  $region5: #{tpu_custom_call.1} parent=0 // loop_body
    %s18 = ssub.s32 %s13, 1
    %s19 = ssub.s32 %s13, 2
    %s20 = sadd.s32 %s13, 1
    %s21 = ssub.s32 %s13, %s20
    %p22 = scmp.eq.s32.totalorder %s21, 0
    %s24 = sadd.s32 %s23, 1
    %s25 = scalar_select %p22, %s23, %s24
    %p28 = pneg %p22
    %p29 = scmp.eq.s32.totalorder %s13, 2
    %p30 = por %p28, %p29
    %p31 = scmp.ne.s32.totalorder %s23, %s26
    %p32 = scmp.eq.s32.totalorder %s13, 0
    %p33 = por %p31, %p32
    %p34 = scmp.ne.s32.totalorder %s23, %s26
    %p35 = scmp.eq.s32.totalorder %s18, 2
    %p36 = por %p34, %p35
    %p37 = scmp.ne.s32.totalorder %s26, %s27
    %p38 = scmp.eq.s32.totalorder %s18, 0
    %p39 = por %p37, %p38
    %p40 = scmp.ne.s32.totalorder %s26, %s27
    %p41 = scmp.eq.s32.totalorder %s19, 2
    %p42 = por %p40, %p41
    %p44 = scmp.ne.s32.totalorder %s27, %s43
    %p45 = scmp.eq.s32.totalorder %s19, 0
    %p46 = por %p44, %p45
    %s48 = sadd.s32 %s47, 1
    %p51 = scmp.eq.s32.totalorder %s13, 2
    %p52 = scmp.ne.s32.totalorder %s47, %s49
    %p53 = scmp.eq.s32.totalorder %s13, 0
    %p54 = por %p52, %p53
    %p55 = scmp.ne.s32.totalorder %s47, %s49
    %p56 = scmp.eq.s32.totalorder %s18, 2
    %p57 = por %p55, %p56
    %p58 = scmp.ne.s32.totalorder %s49, %s50
    %p59 = scmp.eq.s32.totalorder %s18, 0
    %p60 = por %p58, %p59
    %p61 = scmp.ne.s32.totalorder %s49, %s50
    %p62 = scmp.eq.s32.totalorder %s19, 2
    %p63 = por %p61, %p62
    %p65 = scmp.ne.s32.totalorder %s50, %s64
    %p66 = scmp.eq.s32.totalorder %s19, 0
    %p67 = por %p65, %p66
    %s69 = sadd.s32 %s68, 1
    %p72 = scmp.eq.s32.totalorder %s13, 2
    %p73 = scmp.ne.s32.totalorder %s68, %s70
    %p74 = scmp.eq.s32.totalorder %s13, 0
    %p75 = por %p73, %p74
    %p76 = scmp.ne.s32.totalorder %s68, %s70
    %p77 = scmp.eq.s32.totalorder %s18, 2
    %p78 = por %p76, %p77
    %p79 = scmp.ne.s32.totalorder %s70, %s71
    %p80 = scmp.eq.s32.totalorder %s18, 0
    %p81 = por %p79, %p80
    %p82 = scmp.ne.s32.totalorder %s70, %s71
    %p83 = scmp.eq.s32.totalorder %s19, 2
    %p84 = por %p82, %p83
    %p86 = scmp.ne.s32.totalorder %s71, %s85
    %p87 = scmp.eq.s32.totalorder %s19, 0
    %p88 = por %p86, %p87
    %s90 = sadd.s32 %s89, 1
    %p93 = scmp.eq.s32.totalorder %s13, 2
    %p94 = scmp.ne.s32.totalorder %s89, %s91
    %p95 = scmp.eq.s32.totalorder %s13, 0
    %p96 = por %p94, %p95
    %p97 = scmp.ne.s32.totalorder %s89, %s91
    %p98 = scmp.eq.s32.totalorder %s18, 2
    %p99 = por %p97, %p98
    %p100 = scmp.ne.s32.totalorder %s91, %s92
    %p101 = scmp.eq.s32.totalorder %s18, 0
    %p102 = por %p100, %p101
    %p103 = scmp.ne.s32.totalorder %s91, %s92
    %p104 = scmp.eq.s32.totalorder %s19, 2
    %p105 = por %p103, %p104
    %p107 = scmp.ne.s32.totalorder %s92, %s106
    %p108 = scmp.eq.s32.totalorder %s19, 0
    %p109 = por %p107, %p108
    %s111 = sadd.s32 %s110, 1
    %p114 = scmp.eq.s32.totalorder %s13, 2
    %p115 = scmp.ne.s32.totalorder %s110, %s112
    %p116 = scmp.eq.s32.totalorder %s13, 0
    %p117 = por %p115, %p116
    %p118 = scmp.ne.s32.totalorder %s110, %s112
    %p119 = scmp.eq.s32.totalorder %s18, 2
    %p120 = por %p118, %p119
    %p121 = scmp.ne.s32.totalorder %s112, %s113
    %p122 = scmp.eq.s32.totalorder %s18, 0
    %p123 = por %p121, %p122
    %p124 = scmp.ne.s32.totalorder %s112, %s113
    %p125 = scmp.eq.s32.totalorder %s19, 2
    %p126 = por %p124, %p125
    %p128 = scmp.ne.s32.totalorder %s113, %s127
    %p129 = scmp.eq.s32.totalorder %s19, 0
    %p130 = por %p128, %p129
    %s132 = sadd.s32 %s131, 1
    %p135 = scmp.eq.s32.totalorder %s13, 2
    %p136 = scmp.ne.s32.totalorder %s131, %s133
    %p137 = scmp.eq.s32.totalorder %s13, 0
    %p138 = por %p136, %p137
    %p139 = scmp.ne.s32.totalorder %s131, %s133
    %p140 = scmp.eq.s32.totalorder %s18, 2
    %p141 = por %p139, %p140
    %p142 = scmp.ne.s32.totalorder %s133, %s134
    %p143 = scmp.eq.s32.totalorder %s18, 0
    %p144 = por %p142, %p143
    %p145 = scmp.ne.s32.totalorder %s133, %s134
    %p146 = scmp.eq.s32.totalorder %s19, 2
    %p147 = por %p145, %p146
    %p149 = scmp.ne.s32.totalorder %s134, %s148
    %p150 = scmp.eq.s32.totalorder %s19, 0
    %p151 = por %p149, %p150
    %s153 = sadd.s32 %s152, 1
    %p156 = scmp.eq.s32.totalorder %s13, 2
    %p157 = scmp.ne.s32.totalorder %s152, %s154
    %p158 = scmp.eq.s32.totalorder %s13, 0
    %p159 = por %p157, %p158
    %p160 = scmp.ne.s32.totalorder %s152, %s154
    %p161 = scmp.eq.s32.totalorder %s18, 2
    %p162 = por %p160, %p161
    %p163 = scmp.ne.s32.totalorder %s154, %s155
    %p164 = scmp.eq.s32.totalorder %s18, 0
    %p165 = por %p163, %p164
    %p166 = scmp.ne.s32.totalorder %s154, %s155
    %p167 = scmp.eq.s32.totalorder %s19, 2
    %p168 = por %p166, %p167
    %p170 = scmp.ne.s32.totalorder %s155, %s169
    %p171 = scmp.eq.s32.totalorder %s19, 0
    %p172 = por %p170, %p171
    %s173 = ssub.s32 %s13, %s20
    %p174 = scmp.eq.s32.totalorder %s173, 0
    %s176 = sadd.s32 %s175, 1
    %s177 = scalar_select %p174, %s175, %s176
    %p180 = pneg %p174
    %p181 = scmp.eq.s32.totalorder %s13, 2
    %p182 = por %p180, %p181
    %p183 = scmp.ne.s32.totalorder %s175, %s178
    %p184 = scmp.eq.s32.totalorder %s13, 0
    %p185 = por %p183, %p184
    %p186 = scmp.ne.s32.totalorder %s175, %s178
    %p187 = scmp.eq.s32.totalorder %s18, 2
    %p188 = por %p186, %p187
    %p189 = scmp.ne.s32.totalorder %s178, %s179
    %p190 = scmp.eq.s32.totalorder %s18, 0
    %p191 = por %p189, %p190
    %p192 = scmp.ne.s32.totalorder %s178, %s179
    %p193 = scmp.eq.s32.totalorder %s19, 2
    %p194 = por %p192, %p193
    %p196 = scmp.ne.s32.totalorder %s179, %s195
    %p197 = scmp.eq.s32.totalorder %s19, 0
    %p198 = por %p196, %p197
    %p199 = scmp.le.s32.totalorder 1, %s13
    %p200 = scmp.lt.s32.totalorder %s13, 4
    %p201 = pnand %p199, %p200
    %p202 = pneg %p201
    // Predicated region
    $region9: #{tpu_custom_call.1} parent=5 // pred_check
      _
    $region10: #{tpu_custom_call.1} parent=5 // pred_check_branch
      %204 = sbr.rel (%p201) target = $region12
    $region11: #{tpu_custom_call.1} parent=5 // pred_region
      %s205 = ssub.s32 %s13, 1
      // Predicated region
      $region13: #{tpu_custom_call.1} parent=11 // pred_check
        %p206 = pneg %p60
      $region14: #{tpu_custom_call.1} parent=11 // pred_check_branch
        %208 = sbr.rel (%p206) target = $region16
      $region15: #{tpu_custom_call.1} parent=11 // pred_region
        _
      $region16: #{tpu_custom_call.1} parent=11 // pred_fallthru
        _
      // Predicated region
      $region17: #{tpu_custom_call.1} parent=11 // pred_check
        %p209 = pneg %p81
      $region18: #{tpu_custom_call.1} parent=11 // pred_check_branch
        %211 = sbr.rel (%p209) target = $region20
      $region19: #{tpu_custom_call.1} parent=11 // pred_region
        _
      $region20: #{tpu_custom_call.1} parent=11 // pred_fallthru
        _
      // Predicated region
      $region21: #{tpu_custom_call.1} parent=11 // pred_check
        %p212 = pneg %p102
      $region22: #{tpu_custom_call.1} parent=11 // pred_check_branch
        %214 = sbr.rel (%p212) target = $region24
      $region23: #{tpu_custom_call.1} parent=11 // pred_region
        _
      $region24: #{tpu_custom_call.1} parent=11 // pred_fallthru
        _
      // Predicated region
      $region25: #{tpu_custom_call.1} parent=11 // pred_check
        %p215 = pneg %p123
      $region26: #{tpu_custom_call.1} parent=11 // pred_check_branch
        %217 = sbr.rel (%p215) target = $region28
      $region27: #{tpu_custom_call.1} parent=11 // pred_region
        _
      $region28: #{tpu_custom_call.1} parent=11 // pred_fallthru
        _
      // Predicated region
      $region29: #{tpu_custom_call.1} parent=11 // pred_check
        %p218 = pneg %p144
      $region30: #{tpu_custom_call.1} parent=11 // pred_check_branch
        %220 = sbr.rel (%p218) target = $region32
      $region31: #{tpu_custom_call.1} parent=11 // pred_region
        _
      $region32: #{tpu_custom_call.1} parent=11 // pred_fallthru
        _
      // Predicated region
      $region33: #{tpu_custom_call.1} parent=11 // pred_check
        %p221 = pneg %p165
      $region34: #{tpu_custom_call.1} parent=11 // pred_check_branch
        %223 = sbr.rel (%p221) target = $region36
      $region35: #{tpu_custom_call.1} parent=11 // pred_region
        _
      $region36: #{tpu_custom_call.1} parent=11 // pred_fallthru
        _
    $region12: #{tpu_custom_call.1} parent=5 // pred_fallthru
      _
    %p224 = scmp.lt.s32.totalorder %s13, 3
    // Predicated region
    $region37: #{tpu_custom_call.1} parent=5 // pred_check
      %p225 = pneg %p224
    $region38: #{tpu_custom_call.1} parent=5 // pred_check_branch
      %227 = sbr.rel (%p225) target = $region40
    $region39: #{tpu_custom_call.1} parent=5 // pred_region
      // Predicated region
      $region41: #{tpu_custom_call.1} parent=39 // pred_check
        %p228 = pneg %p33
      $region42: #{tpu_custom_call.1} parent=39 // pred_check_branch
        %230 = sbr.rel (%p228) target = $region44
      $region43: #{tpu_custom_call.1} parent=39 // pred_region
        %s231 = smul.u32 16, %s13
        %p232 = scmp.lt.s32.totalorder %s231, 47
        %s233 = scalar_select %p232, %s231, 47
        %s234 = smul.addr %s233, 8
        %s235 = scalar_lea.vmem %s0, %s234
        %s236 = smul.u32 16, %s13
      $region44: #{tpu_custom_call.1} parent=39 // pred_fallthru
        _
    $region40: #{tpu_custom_call.1} parent=5 // pred_fallthru
      _
    %p237 = scmp.le.s32.totalorder 1, %s13
    %p238 = scmp.lt.s32.totalorder %s13, 4
    %p239 = pnand %p237, %p238
    %p240 = pneg %p239
    // Predicated region
    $region45: #{tpu_custom_call.1} parent=5 // pred_check
      _
    $region46: #{tpu_custom_call.1} parent=5 // pred_check_branch
      %242 = sbr.rel (%p239) target = $region48
    $region47: #{tpu_custom_call.1} parent=5 // pred_region
      %s243 = ssub.s32 %s13, 1
      %s244 = smul.u32 16, %s18
      %p245 = scmp.lt.s32.totalorder %s244, 47
      %s246 = scalar_select %p245, %s244, 47
      %s247 = smul.addr %s246, 8
      %s248 = scalar_lea.vmem %s0, %s247
      %p249 = pneg %p39
      %p250 = pneg %p36
      %p251 = pneg %p60
      %p252 = pneg %p57
      %p253 = pneg %p81
      %p254 = pneg %p78
      %p255 = pneg %p102
      %p256 = pneg %p99
      %p257 = pneg %p123
      %p258 = pneg %p120
      %p259 = pneg %p144
      %p260 = pneg %p141
      %p261 = pneg %p165
      %p262 = pneg %p162
      %p263 = pneg %p191
      %p264 = pneg %p188
      %s265 = smul.u32 16, %s18
      %p266 = scmp.lt.s32.totalorder %s265, 47
      %s267 = scalar_select %p266, %s265, 47
      %s268 = smul.addr %s267, 8
      %s269 = scalar_lea.vmem %s7, %s268
      %s270 = smul.u32 16, %s18
      %p271 = scmp.lt.s32.totalorder %s270, 47
      %s272 = scalar_select %p271, %s270, 47
      %s273 = smul.addr %s272, 8
      %s274 = scalar_lea.vmem %s0, %s273
      %s275 = smul.u32 16, %s18
      %s276 = smul.u32 16, %s18
      %p277 = scmp.lt.s32.totalorder %s276, 47
      %s278 = scalar_select %p277, %s276, 47
      %s279 = smul.addr %s278, 8
      %s280 = scalar_lea.vmem %s7, %s279
      %s281 = smul.u32 16, %s18
      %283 = vst [vmem:[#allocation2] sm:$0xf] 0
      %284 = vst [vmem:[#allocation2 + $0x4] sm:$0xf] 0
      %285 = vst [vmem:[#allocation2 + $0x8] sm:$0xf] 0
      %286 = vst [vmem:[#allocation2 + $0xc] sm:$0xf] 0
      %287 = vst [vmem:[#allocation2 + $0x10] sm:$0xf] 0
      %288 = vst [vmem:[#allocation2 + $0x14] sm:$0xf] 0
      %289 = vst [vmem:[#allocation2 + $0x18] sm:$0xf] 0
      %290 = vst [vmem:[#allocation2 + $0x1c] sm:$0xf] 0
      %291 = vst [vmem:[#allocation2 + $0x20] sm:$0xf] 0
      %292 = vst [vmem:[#allocation2 + $0x24] sm:$0xf] 0
      %293 = vst [vmem:[#allocation2 + $0x28] sm:$0xf] 0
      %294 = vst [vmem:[#allocation2 + $0x2c] sm:$0xf] 0
      %295 = vst [vmem:[#allocation2 + $0x30] sm:$0xf] 0
      %296 = vst [vmem:[#allocation2 + $0x34] sm:$0xf] 0
      %297 = vst [vmem:[#allocation2 + $0x38] sm:$0xf] 0
      %298 = vst [vmem:[#allocation2 + $0x3c] sm:$0xf] 0
      %v299 = vld [vmem:[%s274] sm:$0xff]
      %v300 = vld [vmem:[%s274 + $0x8] sm:$0xff]
      %v301 = vld [vmem:[%s274 + $0x10] sm:$0xff]
      %v302 = vld [vmem:[%s274 + $0x18] sm:$0xff]
      %v303 = vld [vmem:[%s274 + $0x20] sm:$0xff]
      %v304 = vld [vmem:[%s274 + $0x28] sm:$0xff]
      %v305 = vld [vmem:[%s274 + $0x30] sm:$0xff]
      %v306 = vld [vmem:[%s274 + $0x38] sm:$0xff]
      %v307 = vld [vmem:[%s274 + $0x40] sm:$0xff]
      %v308 = vld [vmem:[%s274 + $0x48] sm:$0xff]
      %v309 = vld [vmem:[%s274 + $0x50] sm:$0xff]
      %v310 = vld [vmem:[%s274 + $0x58] sm:$0xff]
      %v311 = vld [vmem:[%s274 + $0x60] sm:$0xff]
      %v312 = vld [vmem:[%s274 + $0x68] sm:$0xff]
      %v313 = vld [vmem:[%s274 + $0x70] sm:$0xff]
      %v314 = vld [vmem:[%s274 + $0x78] sm:$0xff]
      %v315 = vpack.c.bf16 %v300, %v299
      %v316 = vpack.c.bf16 %v302, %v301
      %v317 = vpack.c.bf16 %v304, %v303
      %v318 = vpack.c.bf16 %v306, %v305
      %v319 = vpack.c.bf16 %v308, %v307
      %v320 = vpack.c.bf16 %v310, %v309
      %v321 = vpack.c.bf16 %v312, %v311
      %v322 = vpack.c.bf16 %v314, %v313
      %v331 = vunpack.c.l.b16 %v315
      %v332 = vunpack.c.h.b16 %v315
      %v333 = vunpack.c.l.b16 %v316
      %v334 = vunpack.c.h.b16 %v316
      %v335 = vunpack.c.l.b16 %v317
      %v336 = vunpack.c.h.b16 %v317
      %v337 = vunpack.c.l.b16 %v318
      %v338 = vunpack.c.h.b16 %v318
      %v339 = vunpack.c.l.b16 %v319
      %v340 = vunpack.c.h.b16 %v319
      %v341 = vunpack.c.l.b16 %v320
      %v342 = vunpack.c.h.b16 %v320
      %v343 = vunpack.c.l.b16 %v321
      %v344 = vunpack.c.h.b16 %v321
      %v345 = vunpack.c.l.b16 %v322
      %v346 = vunpack.c.h.b16 %v322
      %v347 = vpack.c.b16 %v331, %v331
      %v348 = vpack.c.b16 %v332, %v332
      %v349 = vpack.c.b16 %v333, %v333
      %v350 = vpack.c.b16 %v334, %v334
      %v351 = vpack.c.b16 %v335, %v335
      %v352 = vpack.c.b16 %v336, %v336
      %v353 = vpack.c.b16 %v337, %v337
      %v354 = vpack.c.b16 %v338, %v338
      %v355 = vpack.c.b16 %v339, %v339
      %v356 = vpack.c.b16 %v340, %v340
      %v357 = vpack.c.b16 %v341, %v341
      %v358 = vpack.c.b16 %v342, %v342
      %v359 = vpack.c.b16 %v343, %v343
      %v360 = vpack.c.b16 %v344, %v344
      %v361 = vpack.c.b16 %v345, %v345
      %v362 = vpack.c.b16 %v346, %v346
      %vm379 = vcmask 68608
      %380 = vst.msk [vmem:[#allocation2] sm:$0xf] %vm379, %v347
      %381 = vst.msk [vmem:[#allocation2 + $0x4] sm:$0xf] %vm379, %v348
      %382 = vst.msk [vmem:[#allocation2 + $0x8] sm:$0xf] %vm379, %v349
      %383 = vst.msk [vmem:[#allocation2 + $0xc] sm:$0xf] %vm379, %v350
      %384 = vst.msk [vmem:[#allocation2 + $0x10] sm:$0xf] %vm379, %v351
      %385 = vst.msk [vmem:[#allocation2 + $0x14] sm:$0xf] %vm379, %v352
      %386 = vst.msk [vmem:[#allocation2 + $0x18] sm:$0xf] %vm379, %v353
      %387 = vst.msk [vmem:[#allocation2 + $0x1c] sm:$0xf] %vm379, %v354
      %388 = vst.msk [vmem:[#allocation2 + $0x20] sm:$0xf] %vm379, %v355
      %389 = vst.msk [vmem:[#allocation2 + $0x24] sm:$0xf] %vm379, %v356
      %390 = vst.msk [vmem:[#allocation2 + $0x28] sm:$0xf] %vm379, %v357
      %391 = vst.msk [vmem:[#allocation2 + $0x2c] sm:$0xf] %vm379, %v358
      %392 = vst.msk [vmem:[#allocation2 + $0x30] sm:$0xf] %vm379, %v359
      %393 = vst.msk [vmem:[#allocation2 + $0x34] sm:$0xf] %vm379, %v360
      %394 = vst.msk [vmem:[#allocation2 + $0x38] sm:$0xf] %vm379, %v361
      %395 = vst.msk [vmem:[#allocation2 + $0x3c] sm:$0xf] %vm379, %v362
      %v396 = vld [vmem:[#allocation2] sm:$0xf]
      %v397 = vld [vmem:[#allocation2 + $0x4] sm:$0xf]
      %v398 = vld [vmem:[#allocation2 + $0x8] sm:$0xf]
      %v399 = vld [vmem:[#allocation2 + $0xc] sm:$0xf]
      %v400 = vld [vmem:[#allocation2 + $0x10] sm:$0xf]
      %v401 = vld [vmem:[#allocation2 + $0x14] sm:$0xf]
      %v402 = vld [vmem:[#allocation2 + $0x18] sm:$0xf]
      %v403 = vld [vmem:[#allocation2 + $0x1c] sm:$0xf]
      %v404 = vld [vmem:[#allocation2 + $0x20] sm:$0xf]
      %v405 = vld [vmem:[#allocation2 + $0x24] sm:$0xf]
      %v406 = vld [vmem:[#allocation2 + $0x28] sm:$0xf]
      %v407 = vld [vmem:[#allocation2 + $0x2c] sm:$0xf]
      %v408 = vld [vmem:[#allocation2 + $0x30] sm:$0xf]
      %v409 = vld [vmem:[#allocation2 + $0x34] sm:$0xf]
      %v410 = vld [vmem:[#allocation2 + $0x38] sm:$0xf]
      %v411 = vld [vmem:[#allocation2 + $0x3c] sm:$0xf]
      %v412 = vld [vmem:[%s1] sm:$0xf]
      %v413 = vld [vmem:[%s1 + $0x4] sm:$0xf]
      %v414 = vld [vmem:[%s1 + $0x8] sm:$0xf]
      %v415 = vld [vmem:[%s1 + $0xc] sm:$0xf]
      %v416 = vld [vmem:[%s1 + $0x10] sm:$0xf]
      %v417 = vld [vmem:[%s1 + $0x14] sm:$0xf]
      %v418 = vld [vmem:[%s1 + $0x18] sm:$0xf]
      %v419 = vld [vmem:[%s1 + $0x1c] sm:$0xf]
      %v420 = vld [vmem:[%s1 + $0x20] sm:$0xf]
      %v421 = vld [vmem:[%s1 + $0x24] sm:$0xf]
      %v422 = vld [vmem:[%s1 + $0x28] sm:$0xf]
      %v423 = vld [vmem:[%s1 + $0x2c] sm:$0xf]
      %v424 = vld [vmem:[%s1 + $0x30] sm:$0xf]
      %v425 = vld [vmem:[%s1 + $0x34] sm:$0xf]
      %v426 = vld [vmem:[%s1 + $0x38] sm:$0xf]
      %v427 = vld [vmem:[%s1 + $0x3c] sm:$0xf]
      %v428 = vld [vmem:[%s2] sm:$0x1]
      %v430 = vlaneseq
      %v431 = vshrl.u32 %v430, 7
      %v432 = vsub.s32 0, %v431
      %v433 = vrot.slane %v428, %v432
      %v451 = vunpack.c.l.b16 %v396
      %v452 = vunpack.c.l.b16 %v397
      %v453 = vunpack.c.l.b16 %v398
      %v454 = vunpack.c.l.b16 %v399
      %v455 = vunpack.c.l.b16 %v400
      %v456 = vunpack.c.l.b16 %v401
      %v457 = vunpack.c.l.b16 %v402
      %v458 = vunpack.c.l.b16 %v403
      %v459 = vunpack.c.l.b16 %v404
      %v460 = vunpack.c.l.b16 %v405
      %v461 = vunpack.c.l.b16 %v406
      %v462 = vunpack.c.l.b16 %v407
      %v463 = vunpack.c.l.b16 %v408
      %v464 = vunpack.c.l.b16 %v409
      %v465 = vunpack.c.l.b16 %v410
      %v466 = vunpack.c.l.b16 %v411
      %v467 = vpack.c.b16 %v452, %v451
      %v468 = vpack.c.b16 %v454, %v453
      %v469 = vpack.c.b16 %v456, %v455
      %v470 = vpack.c.b16 %v458, %v457
      %v471 = vpack.c.b16 %v460, %v459
      %v472 = vpack.c.b16 %v462, %v461
      %v473 = vpack.c.b16 %v464, %v463
      %v474 = vpack.c.b16 %v466, %v465
      %v499 = vunpack.c.l.b16 %v412
      %v500 = vunpack.c.l.b16 %v413
      %v501 = vunpack.c.l.b16 %v414
      %v502 = vunpack.c.l.b16 %v415
      %v503 = vunpack.c.l.b16 %v416
      %v504 = vunpack.c.l.b16 %v417
      %v505 = vunpack.c.l.b16 %v418
      %v506 = vunpack.c.l.b16 %v419
      %v507 = vunpack.c.l.b16 %v420
      %v508 = vunpack.c.l.b16 %v421
      %v509 = vunpack.c.l.b16 %v422
      %v510 = vunpack.c.l.b16 %v423
      %v511 = vunpack.c.l.b16 %v424
      %v512 = vunpack.c.l.b16 %v425
      %v513 = vunpack.c.l.b16 %v426
      %v514 = vunpack.c.l.b16 %v427
      %v515 = vpack.c.b16 %v500, %v499
      %v516 = vpack.c.b16 %v502, %v501
      %v517 = vpack.c.b16 %v504, %v503
      %v518 = vpack.c.b16 %v506, %v505
      %v519 = vpack.c.b16 %v508, %v507
      %v520 = vpack.c.b16 %v510, %v509
      %v521 = vpack.c.b16 %v512, %v511
      %v522 = vpack.c.b16 %v514, %v513
      %531 = vmatprep.subr.bf16.mxu0 0
      %532 = vmatpush1.bf16.msra.mxu0 %v522
      %533 = vmatprep.subr.bf16.mxu0 0
      %534 = vmatpush1.bf16.msra.mxu0 %v521
      %535 = vmatprep.subr.bf16.mxu0 0
      %536 = vmatpush1.bf16.msra.mxu0 %v520
      %537 = vmatprep.subr.bf16.mxu0 0
      %538 = vmatpush1.bf16.msra.mxu0 %v519
      %539 = vmatprep.subr.bf16.mxu0 0
      %540 = vmatpush1.bf16.msra.mxu0 %v518
      %541 = vmatprep.subr.bf16.mxu0 0
      %542 = vmatpush1.bf16.msra.mxu0 %v517
      %543 = vmatprep.subr.bf16.mxu0 0
      %544 = vmatpush1.bf16.msra.mxu0 %v516
      %545 = vmatprep.subr.bf16.mxu0 0
      %546 = vmatpush1.bf16.msra.mxu0 %v515
      %547 = vmatprep.subr.bf16.mxu0 0
      %548 = vmatpush2.bf16.msra.mxu0 0
      %549 = vmatprep.subr.bf16.mxu0 0
      %550 = vmatpush2.bf16.msra.mxu0 0
      %551 = vmatprep.subr.bf16.mxu0 0
      %552 = vmatpush2.bf16.msra.mxu0 0
      %553 = vmatprep.subr.bf16.mxu0 0
      %554 = vmatpush2.bf16.msra.mxu0 0
      %555 = vmatprep.subr.bf16.mxu0 0
      %556 = vmatpush2.bf16.msra.mxu0 0
      %557 = vmatprep.subr.bf16.mxu0 0
      %558 = vmatpush2.bf16.msra.mxu0 0
      %559 = vmatprep.subr.bf16.mxu0 0
      %560 = vmatpush2.bf16.msra.mxu0 0
      %561 = vmatprep.subr.bf16.mxu0 0
      %562 = vmatpush2.bf16.msra.mxu0 0
      %563 = vmatprep.mubr.bf16.mxu0 0
      %564 = vmatmul.mubr.bf16.gmra.mxu0 %v467
      %v565 = vpop.f32.mrf.mxu0
      %v566 = vadd.f32 %v433, %v565
      %v567 = vpop.f32.mrf.mxu0
      %v568 = vpop.f32.mrf.mxu0
      %v569 = vadd.f32 %v433, %v568
      %v570 = vpop.f32.mrf.mxu0
      %571 = vmatprep.mubr.bf16.mxu0 0
      %572 = vmatmul.mubr.bf16.gmra.mxu0 %v468
      %v573 = vpop.f32.mrf.mxu0
      %v574 = vadd.f32 %v433, %v573
      %v575 = vpop.f32.mrf.mxu0
      %v576 = vpop.f32.mrf.mxu0
      %v577 = vadd.f32 %v433, %v576
      %v578 = vpop.f32.mrf.mxu0
      %579 = vmatprep.mubr.bf16.mxu0 0
      %580 = vmatmul.mubr.bf16.gmra.mxu0 %v469
      %v581 = vpop.f32.mrf.mxu0
      %v582 = vadd.f32 %v433, %v581
      %v583 = vpop.f32.mrf.mxu0
      %v584 = vpop.f32.mrf.mxu0
      %v585 = vadd.f32 %v433, %v584
      %v586 = vpop.f32.mrf.mxu0
      %587 = vmatprep.mubr.bf16.mxu0 0
      %588 = vmatmul.mubr.bf16.gmra.mxu0 %v470
      %v589 = vpop.f32.mrf.mxu0
      %v590 = vadd.f32 %v433, %v589
      %v591 = vpop.f32.mrf.mxu0
      %v592 = vpop.f32.mrf.mxu0
      %v593 = vadd.f32 %v433, %v592
      %v594 = vpop.f32.mrf.mxu0
      %595 = vmatprep.mubr.bf16.mxu0 0
      %596 = vmatmul.mubr.bf16.gmra.mxu0 %v471
      %v597 = vpop.f32.mrf.mxu0
      %v598 = vadd.f32 %v433, %v597
      %v599 = vpop.f32.mrf.mxu0
      %v600 = vpop.f32.mrf.mxu0
      %v601 = vadd.f32 %v433, %v600
      %v602 = vpop.f32.mrf.mxu0
      %603 = vmatprep.mubr.bf16.mxu0 0
      %604 = vmatmul.mubr.bf16.gmra.mxu0 %v472
      %v605 = vpop.f32.mrf.mxu0
      %v606 = vadd.f32 %v433, %v605
      %v607 = vpop.f32.mrf.mxu0
      %v608 = vpop.f32.mrf.mxu0
      %v609 = vadd.f32 %v433, %v608
      %v610 = vpop.f32.mrf.mxu0
      %611 = vmatprep.mubr.bf16.mxu0 0
      %612 = vmatmul.mubr.bf16.gmra.mxu0 %v473
      %v613 = vpop.f32.mrf.mxu0
      %v614 = vadd.f32 %v433, %v613
      %v615 = vpop.f32.mrf.mxu0
      %v616 = vpop.f32.mrf.mxu0
      %v617 = vadd.f32 %v433, %v616
      %v618 = vpop.f32.mrf.mxu0
      %619 = vmatprep.mubr.bf16.mxu0 0
      %620 = vmatmul.mubr.bf16.gmra.mxu0 %v474
      %v621 = vpop.f32.mrf.mxu0
      %v622 = vadd.f32 %v433, %v621
      %v623 = vpop.f32.mrf.mxu0
      %v624 = vpop.f32.mrf.mxu0
      %v625 = vadd.f32 %v433, %v624
      %v626 = vpop.f32.mrf.mxu0
      %627 = vdwg.mxu0
      %v628 = vmax.f32 %v566, 0.0
      %v629 = vmax.f32 %v569, 0.0
      %v630 = vmax.f32 %v574, 0.0
      %v631 = vmax.f32 %v577, 0.0
      %v632 = vmax.f32 %v582, 0.0
      %v633 = vmax.f32 %v585, 0.0
      %v634 = vmax.f32 %v590, 0.0
      %v635 = vmax.f32 %v593, 0.0
      %v636 = vmax.f32 %v598, 0.0
      %v637 = vmax.f32 %v601, 0.0
      %v638 = vmax.f32 %v606, 0.0
      %v639 = vmax.f32 %v609, 0.0
      %v640 = vmax.f32 %v614, 0.0
      %v641 = vmax.f32 %v617, 0.0
      %v642 = vmax.f32 %v622, 0.0
      %v643 = vmax.f32 %v625, 0.0
      %v644 = vpack.c.bf16 %v629, %v628
      %v645 = vpack.c.bf16 %v631, %v630
      %v646 = vpack.c.bf16 %v633, %v632
      %v647 = vpack.c.bf16 %v635, %v634
      %v648 = vpack.c.bf16 %v637, %v636
      %v649 = vpack.c.bf16 %v639, %v638
      %v650 = vpack.c.bf16 %v641, %v640
      %v651 = vpack.c.bf16 %v643, %v642
      %v652 = vld [vmem:[%s3] sm:$0xf]
      %v653 = vld [vmem:[%s3 + $0x4] sm:$0xf]
      %v654 = vld [vmem:[%s3 + $0x8] sm:$0xf]
      %v655 = vld [vmem:[%s3 + $0xc] sm:$0xf]
      %v656 = vld [vmem:[%s3 + $0x10] sm:$0xf]
      %v657 = vld [vmem:[%s3 + $0x14] sm:$0xf]
      %v658 = vld [vmem:[%s3 + $0x18] sm:$0xf]
      %v659 = vld [vmem:[%s3 + $0x1c] sm:$0xf]
      %v660 = vld [vmem:[%s3 + $0x20] sm:$0xf]
      %v661 = vld [vmem:[%s3 + $0x24] sm:$0xf]
      %v662 = vld [vmem:[%s3 + $0x28] sm:$0xf]
      %v663 = vld [vmem:[%s3 + $0x2c] sm:$0xf]
      %v664 = vld [vmem:[%s3 + $0x30] sm:$0xf]
      %v665 = vld [vmem:[%s3 + $0x34] sm:$0xf]
      %v666 = vld [vmem:[%s3 + $0x38] sm:$0xf]
      %v667 = vld [vmem:[%s3 + $0x3c] sm:$0xf]
      %v668 = vld [vmem:[%s4] sm:$0x1]
      %v670 = vlaneseq
      %v671 = vshrl.u32 %v670, 7
      %v672 = vsub.s32 0, %v671
      %v673 = vrot.slane %v668, %v672
      %v691 = vunpack.c.l.b16 %v652
      %v692 = vunpack.c.l.b16 %v653
      %v693 = vunpack.c.l.b16 %v654
      %v694 = vunpack.c.l.b16 %v655
      %v695 = vunpack.c.l.b16 %v656
      %v696 = vunpack.c.l.b16 %v657
      %v697 = vunpack.c.l.b16 %v658
      %v698 = vunpack.c.l.b16 %v659
      %v699 = vunpack.c.l.b16 %v660
      %v700 = vunpack.c.l.b16 %v661
      %v701 = vunpack.c.l.b16 %v662
      %v702 = vunpack.c.l.b16 %v663
      %v703 = vunpack.c.l.b16 %v664
      %v704 = vunpack.c.l.b16 %v665
      %v705 = vunpack.c.l.b16 %v666
      %v706 = vunpack.c.l.b16 %v667
      %v707 = vpack.c.b16 %v692, %v691
      %v708 = vpack.c.b16 %v694, %v693
      %v709 = vpack.c.b16 %v696, %v695
      %v710 = vpack.c.b16 %v698, %v697
      %v711 = vpack.c.b16 %v700, %v699
      %v712 = vpack.c.b16 %v702, %v701
      %v713 = vpack.c.b16 %v704, %v703
      %v714 = vpack.c.b16 %v706, %v705
      %723 = vmatprep.subr.bf16.mxu0 0
      %724 = vmatpush1.bf16.msra.mxu0 %v714
      %725 = vmatprep.subr.bf16.mxu0 0
      %726 = vmatpush1.bf16.msra.mxu0 %v713
      %727 = vmatprep.subr.bf16.mxu0 0
      %728 = vmatpush1.bf16.msra.mxu0 %v712
      %729 = vmatprep.subr.bf16.mxu0 0
      %730 = vmatpush1.bf16.msra.mxu0 %v711
      %731 = vmatprep.subr.bf16.mxu0 0
      %732 = vmatpush1.bf16.msra.mxu0 %v710
      %733 = vmatprep.subr.bf16.mxu0 0
      %734 = vmatpush1.bf16.msra.mxu0 %v709
      %735 = vmatprep.subr.bf16.mxu0 0
      %736 = vmatpush1.bf16.msra.mxu0 %v708
      %737 = vmatprep.subr.bf16.mxu0 0
      %738 = vmatpush1.bf16.msra.mxu0 %v707
      %739 = vmatprep.subr.bf16.mxu0 0
      %740 = vmatpush2.bf16.msra.mxu0 0
      %741 = vmatprep.subr.bf16.mxu0 0
      %742 = vmatpush2.bf16.msra.mxu0 0
      %743 = vmatprep.subr.bf16.mxu0 0
      %744 = vmatpush2.bf16.msra.mxu0 0
      %745 = vmatprep.subr.bf16.mxu0 0
      %746 = vmatpush2.bf16.msra.mxu0 0
      %747 = vmatprep.subr.bf16.mxu0 0
      %748 = vmatpush2.bf16.msra.mxu0 0
      %749 = vmatprep.subr.bf16.mxu0 0
      %750 = vmatpush2.bf16.msra.mxu0 0
      %751 = vmatprep.subr.bf16.mxu0 0
      %752 = vmatpush2.bf16.msra.mxu0 0
      %753 = vmatprep.subr.bf16.mxu0 0
      %754 = vmatpush2.bf16.msra.mxu0 0
      %755 = vmatprep.mubr.bf16.mxu0 0
      %756 = vmatmul.mubr.bf16.gmra.mxu0 %v644
      %v757 = vpop.f32.mrf.mxu0
      %v758 = vadd.f32 %v673, %v757
      %v759 = vpop.f32.mrf.mxu0
      %v760 = vpop.f32.mrf.mxu0
      %v761 = vadd.f32 %v673, %v760
      %v762 = vpop.f32.mrf.mxu0
      %763 = vmatprep.mubr.bf16.mxu0 0
      %764 = vmatmul.mubr.bf16.gmra.mxu0 %v645
      %v765 = vpop.f32.mrf.mxu0
      %v766 = vadd.f32 %v673, %v765
      %v767 = vpop.f32.mrf.mxu0
      %v768 = vpop.f32.mrf.mxu0
      %v769 = vadd.f32 %v673, %v768
      %v770 = vpop.f32.mrf.mxu0
      %771 = vmatprep.mubr.bf16.mxu0 0
      %772 = vmatmul.mubr.bf16.gmra.mxu0 %v646
      %v773 = vpop.f32.mrf.mxu0
      %v774 = vadd.f32 %v673, %v773
      %v775 = vpop.f32.mrf.mxu0
      %v776 = vpop.f32.mrf.mxu0
      %v777 = vadd.f32 %v673, %v776
      %v778 = vpop.f32.mrf.mxu0
      %779 = vmatprep.mubr.bf16.mxu0 0
      %780 = vmatmul.mubr.bf16.gmra.mxu0 %v647
      %v781 = vpop.f32.mrf.mxu0
      %v782 = vadd.f32 %v673, %v781
      %v783 = vpop.f32.mrf.mxu0
      %v784 = vpop.f32.mrf.mxu0
      %v785 = vadd.f32 %v673, %v784
      %v786 = vpop.f32.mrf.mxu0
      %787 = vmatprep.mubr.bf16.mxu0 0
      %788 = vmatmul.mubr.bf16.gmra.mxu0 %v648
      %v789 = vpop.f32.mrf.mxu0
      %v790 = vadd.f32 %v673, %v789
      %v791 = vpop.f32.mrf.mxu0
      %v792 = vpop.f32.mrf.mxu0
      %v793 = vadd.f32 %v673, %v792
      %v794 = vpop.f32.mrf.mxu0
      %795 = vmatprep.mubr.bf16.mxu0 0
      %796 = vmatmul.mubr.bf16.gmra.mxu0 %v649
      %v797 = vpop.f32.mrf.mxu0
      %v798 = vadd.f32 %v673, %v797
      %v799 = vpop.f32.mrf.mxu0
      %v800 = vpop.f32.mrf.mxu0
      %v801 = vadd.f32 %v673, %v800
      %v802 = vpop.f32.mrf.mxu0
      %803 = vmatprep.mubr.bf16.mxu0 0
      %804 = vmatmul.mubr.bf16.gmra.mxu0 %v650
      %v805 = vpop.f32.mrf.mxu0
      %v806 = vadd.f32 %v673, %v805
      %v807 = vpop.f32.mrf.mxu0
      %v808 = vpop.f32.mrf.mxu0
      %v809 = vadd.f32 %v673, %v808
      %v810 = vpop.f32.mrf.mxu0
      %811 = vmatprep.mubr.bf16.mxu0 0
      %812 = vmatmul.mubr.bf16.gmra.mxu0 %v651
      %v813 = vpop.f32.mrf.mxu0
      %v814 = vadd.f32 %v673, %v813
      %v815 = vpop.f32.mrf.mxu0
      %v816 = vpop.f32.mrf.mxu0
      %v817 = vadd.f32 %v673, %v816
      %v818 = vpop.f32.mrf.mxu0
      %819 = vdwg.mxu0
      %v820 = vmax.f32 %v758, 0.0
      %v821 = vmax.f32 %v761, 0.0
      %v822 = vmax.f32 %v766, 0.0
      %v823 = vmax.f32 %v769, 0.0
      %v824 = vmax.f32 %v774, 0.0
      %v825 = vmax.f32 %v777, 0.0
      %v826 = vmax.f32 %v782, 0.0
      %v827 = vmax.f32 %v785, 0.0
      %v828 = vmax.f32 %v790, 0.0
      %v829 = vmax.f32 %v793, 0.0
      %v830 = vmax.f32 %v798, 0.0
      %v831 = vmax.f32 %v801, 0.0
      %v832 = vmax.f32 %v806, 0.0
      %v833 = vmax.f32 %v809, 0.0
      %v834 = vmax.f32 %v814, 0.0
      %v835 = vmax.f32 %v817, 0.0
      %v836 = vpack.c.bf16 %v821, %v820
      %v837 = vpack.c.bf16 %v823, %v822
      %v838 = vpack.c.bf16 %v825, %v824
      %v839 = vpack.c.bf16 %v827, %v826
      %v840 = vpack.c.bf16 %v829, %v828
      %v841 = vpack.c.bf16 %v831, %v830
      %v842 = vpack.c.bf16 %v833, %v832
      %v843 = vpack.c.bf16 %v835, %v834
      %v844 = vld [vmem:[%s5] sm:$0xf]
      %v845 = vld [vmem:[%s5 + $0x4] sm:$0xf]
      %v846 = vld [vmem:[%s5 + $0x8] sm:$0xf]
      %v847 = vld [vmem:[%s5 + $0xc] sm:$0xf]
      %v848 = vld [vmem:[%s5 + $0x10] sm:$0xf]
      %v849 = vld [vmem:[%s5 + $0x14] sm:$0xf]
      %v850 = vld [vmem:[%s5 + $0x18] sm:$0xf]
      %v851 = vld [vmem:[%s5 + $0x1c] sm:$0xf]
      %v852 = vld [vmem:[%s5 + $0x20] sm:$0xf]
      %v853 = vld [vmem:[%s5 + $0x24] sm:$0xf]
      %v854 = vld [vmem:[%s5 + $0x28] sm:$0xf]
      %v855 = vld [vmem:[%s5 + $0x2c] sm:$0xf]
      %v856 = vld [vmem:[%s5 + $0x30] sm:$0xf]
      %v857 = vld [vmem:[%s5 + $0x34] sm:$0xf]
      %v858 = vld [vmem:[%s5 + $0x38] sm:$0xf]
      %v859 = vld [vmem:[%s5 + $0x3c] sm:$0xf]
      %v876 = vunpack.c.l.b16 %v844
      %v877 = vunpack.c.l.b16 %v845
      %v878 = vunpack.c.l.b16 %v846
      %v879 = vunpack.c.l.b16 %v847
      %v880 = vunpack.c.l.b16 %v848
      %v881 = vunpack.c.l.b16 %v849
      %v882 = vunpack.c.l.b16 %v850
      %v883 = vunpack.c.l.b16 %v851
      %v884 = vunpack.c.l.b16 %v852
      %v885 = vunpack.c.l.b16 %v853
      %v886 = vunpack.c.l.b16 %v854
      %v887 = vunpack.c.l.b16 %v855
      %v888 = vunpack.c.l.b16 %v856
      %v889 = vunpack.c.l.b16 %v857
      %v890 = vunpack.c.l.b16 %v858
      %v891 = vunpack.c.l.b16 %v859
      %v892 = vpack.c.b16 %v877, %v876
      %v893 = vpack.c.b16 %v879, %v878
      %v894 = vpack.c.b16 %v881, %v880
      %v895 = vpack.c.b16 %v883, %v882
      %v896 = vpack.c.b16 %v885, %v884
      %v897 = vpack.c.b16 %v887, %v886
      %v898 = vpack.c.b16 %v889, %v888
      %v899 = vpack.c.b16 %v891, %v890
      %908 = vmatprep.subr.bf16.mxu0 0
      %909 = vmatpush1.bf16.msra.mxu0 %v899
      %910 = vmatprep.subr.bf16.mxu0 0
      %911 = vmatpush1.bf16.msra.mxu0 %v898
      %912 = vmatprep.subr.bf16.mxu0 0
      %913 = vmatpush1.bf16.msra.mxu0 %v897
      %914 = vmatprep.subr.bf16.mxu0 0
      %915 = vmatpush1.bf16.msra.mxu0 %v896
      %916 = vmatprep.subr.bf16.mxu0 0
      %917 = vmatpush1.bf16.msra.mxu0 %v895
      %918 = vmatprep.subr.bf16.mxu0 0
      %919 = vmatpush1.bf16.msra.mxu0 %v894
      %920 = vmatprep.subr.bf16.mxu0 0
      %921 = vmatpush1.bf16.msra.mxu0 %v893
      %922 = vmatprep.subr.bf16.mxu0 0
      %923 = vmatpush1.bf16.msra.mxu0 %v892
      %924 = vmatprep.subr.bf16.mxu0 0
      %925 = vmatpush2.bf16.msra.mxu0 0
      %926 = vmatprep.subr.bf16.mxu0 0
      %927 = vmatpush2.bf16.msra.mxu0 0
      %928 = vmatprep.subr.bf16.mxu0 0
      %929 = vmatpush2.bf16.msra.mxu0 0
      %930 = vmatprep.subr.bf16.mxu0 0
      %931 = vmatpush2.bf16.msra.mxu0 0
      %932 = vmatprep.subr.bf16.mxu0 0
      %933 = vmatpush2.bf16.msra.mxu0 0
      %934 = vmatprep.subr.bf16.mxu0 0
      %935 = vmatpush2.bf16.msra.mxu0 0
      %936 = vmatprep.subr.bf16.mxu0 0
      %937 = vmatpush2.bf16.msra.mxu0 0
      %938 = vmatprep.subr.bf16.mxu0 0
      %939 = vmatpush2.bf16.msra.mxu0 0
      %940 = vmatprep.mubr.bf16.mxu0 0
      %941 = vmatmul.mubr.bf16.gmra.mxu0 %v836
      %v942 = vpop.f32.mrf.mxu0
      %v943 = vadd.f32 0.0, %v942
      %v944 = vpop.f32.mrf.mxu0
      %v945 = vpop.f32.mrf.mxu0
      %v946 = vadd.f32 0.0, %v945
      %v947 = vpop.f32.mrf.mxu0
      %948 = vmatprep.mubr.bf16.mxu0 0
      %949 = vmatmul.mubr.bf16.gmra.mxu0 %v837
      %v950 = vpop.f32.mrf.mxu0
      %v951 = vadd.f32 0.0, %v950
      %v952 = vpop.f32.mrf.mxu0
      %v953 = vpop.f32.mrf.mxu0
      %v954 = vadd.f32 0.0, %v953
      %v955 = vpop.f32.mrf.mxu0
      %956 = vmatprep.mubr.bf16.mxu0 0
      %957 = vmatmul.mubr.bf16.gmra.mxu0 %v838
      %v958 = vpop.f32.mrf.mxu0
      %v959 = vadd.f32 0.0, %v958
      %v960 = vpop.f32.mrf.mxu0
      %v961 = vpop.f32.mrf.mxu0
      %v962 = vadd.f32 0.0, %v961
      %v963 = vpop.f32.mrf.mxu0
      %964 = vmatprep.mubr.bf16.mxu0 0
      %965 = vmatmul.mubr.bf16.gmra.mxu0 %v839
      %v966 = vpop.f32.mrf.mxu0
      %v967 = vadd.f32 0.0, %v966
      %v968 = vpop.f32.mrf.mxu0
      %v969 = vpop.f32.mrf.mxu0
      %v970 = vadd.f32 0.0, %v969
      %v971 = vpop.f32.mrf.mxu0
      %972 = vmatprep.mubr.bf16.mxu0 0
      %973 = vmatmul.mubr.bf16.gmra.mxu0 %v840
      %v974 = vpop.f32.mrf.mxu0
      %v975 = vadd.f32 0.0, %v974
      %v976 = vpop.f32.mrf.mxu0
      %v977 = vpop.f32.mrf.mxu0
      %v978 = vadd.f32 0.0, %v977
      %v979 = vpop.f32.mrf.mxu0
      %980 = vmatprep.mubr.bf16.mxu0 0
      %981 = vmatmul.mubr.bf16.gmra.mxu0 %v841
      %v982 = vpop.f32.mrf.mxu0
      %v983 = vadd.f32 0.0, %v982
      %v984 = vpop.f32.mrf.mxu0
      %v985 = vpop.f32.mrf.mxu0
      %v986 = vadd.f32 0.0, %v985
      %v987 = vpop.f32.mrf.mxu0
      %988 = vmatprep.mubr.bf16.mxu0 0
      %989 = vmatmul.mubr.bf16.gmra.mxu0 %v842
      %v990 = vpop.f32.mrf.mxu0
      %v991 = vadd.f32 0.0, %v990
      %v992 = vpop.f32.mrf.mxu0
      %v993 = vpop.f32.mrf.mxu0
      %v994 = vadd.f32 0.0, %v993
      %v995 = vpop.f32.mrf.mxu0
      %996 = vmatprep.mubr.bf16.mxu0 0
      %997 = vmatmul.mubr.bf16.gmra.mxu0 %v843
      %v998 = vpop.f32.mrf.mxu0
      %v999 = vadd.f32 0.0, %v998
      %v1000 = vpop.f32.mrf.mxu0
      %v1001 = vpop.f32.mrf.mxu0
      %v1002 = vadd.f32 0.0, %v1001
      %v1003 = vpop.f32.mrf.mxu0
      %1004 = vdwg.mxu0
      %v1005 = vld [vmem:[%s6] sm:$0x1]
      %v1007 = vlaneseq
      %v1008 = vshrl.u32 %v1007, 7
      %v1009 = vsub.s32 0, %v1008
      %v1010 = vrot.slane %v1005, %v1009
      %v1012 = vadd.f32 %v943, %v1010
      %v1013 = vadd.f32 %v946, %v1010
      %v1014 = vadd.f32 %v951, %v1010
      %v1015 = vadd.f32 %v954, %v1010
      %v1016 = vadd.f32 %v959, %v1010
      %v1017 = vadd.f32 %v962, %v1010
      %v1018 = vadd.f32 %v967, %v1010
      %v1019 = vadd.f32 %v970, %v1010
      %v1020 = vadd.f32 %v975, %v1010
      %v1021 = vadd.f32 %v978, %v1010
      %v1022 = vadd.f32 %v983, %v1010
      %v1023 = vadd.f32 %v986, %v1010
      %v1024 = vadd.f32 %v991, %v1010
      %v1025 = vadd.f32 %v994, %v1010
      %v1026 = vadd.f32 %v999, %v1010
      %v1027 = vadd.f32 %v1002, %v1010
      %vm1028 = vcmask 72704
      %1029 = vst.msk [vmem:[%s280] sm:$0xff] %vm1028, %v1012
      %1030 = vst.msk [vmem:[%s280 + $0x8] sm:$0xff] %vm1028, %v1013
      %1031 = vst.msk [vmem:[%s280 + $0x10] sm:$0xff] %vm1028, %v1014
      %1032 = vst.msk [vmem:[%s280 + $0x18] sm:$0xff] %vm1028, %v1015
      %1033 = vst.msk [vmem:[%s280 + $0x20] sm:$0xff] %vm1028, %v1016
      %1034 = vst.msk [vmem:[%s280 + $0x28] sm:$0xff] %vm1028, %v1017
      %1035 = vst.msk [vmem:[%s280 + $0x30] sm:$0xff] %vm1028, %v1018
      %1036 = vst.msk [vmem:[%s280 + $0x38] sm:$0xff] %vm1028, %v1019
      %1037 = vst.msk [vmem:[%s280 + $0x40] sm:$0xff] %vm1028, %v1020
      %1038 = vst.msk [vmem:[%s280 + $0x48] sm:$0xff] %vm1028, %v1021
      %1039 = vst.msk [vmem:[%s280 + $0x50] sm:$0xff] %vm1028, %v1022
      %1040 = vst.msk [vmem:[%s280 + $0x58] sm:$0xff] %vm1028, %v1023
      %1041 = vst.msk [vmem:[%s280 + $0x60] sm:$0xff] %vm1028, %v1024
      %1042 = vst.msk [vmem:[%s280 + $0x68] sm:$0xff] %vm1028, %v1025
      %1043 = vst.msk [vmem:[%s280 + $0x70] sm:$0xff] %vm1028, %v1026
      %1044 = vst.msk [vmem:[%s280 + $0x78] sm:$0xff] %vm1028, %v1027
      %s1045 = smul.u32 16, %s18
      %p1046 = scmp.lt.s32.totalorder %s1045, 47
      %s1047 = scalar_select %p1046, %s1045, 47
      %s1048 = smul.addr %s1047, 8
      %s1049 = scalar_lea.vmem %s7, %s1048
      // Predicated region
      $region49: #{tpu_custom_call.1} parent=47 // pred_check
        %p1050 = pneg %p188
      $region50: #{tpu_custom_call.1} parent=47 // pred_check_branch
        %1052 = sbr.rel (%p1050) target = $region52
      $region51: #{tpu_custom_call.1} parent=47 // pred_region
        %s1053 = smul.u32 16, %s18
      $region52: #{tpu_custom_call.1} parent=47 // pred_fallthru
        _
    $region48: #{tpu_custom_call.1} parent=5 // pred_fallthru
      _
    %p1054 = scmp.le.s32.totalorder 2, %s13
    // Predicated region
    $region53: #{tpu_custom_call.1} parent=5 // pred_check
      %p1055 = pneg %p1054
    $region54: #{tpu_custom_call.1} parent=5 // pred_check_branch
      %1057 = sbr.rel (%p1055) target = $region56
    $region55: #{tpu_custom_call.1} parent=5 // pred_region
      %s1058 = ssub.s32 %s13, 2
      // Predicated region
      $region57: #{tpu_custom_call.1} parent=55 // pred_check
        %p1059 = pneg %p194
      $region58: #{tpu_custom_call.1} parent=55 // pred_check_branch
        %1061 = sbr.rel (%p1059) target = $region60
      $region59: #{tpu_custom_call.1} parent=55 // pred_region
        %s1062 = smul.u32 16, %s19
        %p1063 = scmp.lt.s32.totalorder %s1062, 47
        %s1064 = scalar_select %p1063, %s1062, 47
        %s1065 = smul.addr %s1064, 8
        %s1066 = scalar_lea.vmem %s7, %s1065
      $region60: #{tpu_custom_call.1} parent=55 // pred_fallthru
        _
    $region56: #{tpu_custom_call.1} parent=5 // pred_fallthru
      _
  $region6: #{tpu_custom_call.1} parent=0 // loop_footer
    %s17 = sadd.s32 1, %s13
  $region7: #{tpu_custom_call.1} parent=0 // loop_footer_branch
    %12 = sbr.rel target = $region3
  $region8: #{tpu_custom_call.1} parent=0 // loop_exit
    _

</llo_original>
